<compile_context>
chip_gen: v5e
topology: v5e:2x2
jax: 0.10.0
libtpu: 0.0.40
codegen_flags: <defaults>
</compile_context>

<pallas_src>
import functools

import jax
import jax.numpy as jnp
from jax.experimental import pallas as pl
from jax.experimental.pallas import tpu as pltpu


def _block_loss(xr, xc, sq_row, mask, margin):
    """Hinge-loss sum for one block of rows.

    xr:     (bm, d) row block, native dtype (bf16/f32) -> MXU
    xc:     (n,  d) all rows, native dtype
    sq_row: (1,  n) f32 per-column squared norms ||x_j||^2
    mask:   (bm, n) bool, True where labels match
    """
    xr32 = xr.astype(jnp.float32)

    # gram[r, j] = <x_r, x_j>  (MXU, f32 accumulation)
    gram = jax.lax.dot_general(
        xr, xc, (((1,), (1,)), ((), ())), preferred_element_type=jnp.float32
    )                                                         # (bm, n)

    # dist2[r, j] = ||x_r||^2 + ||x_j||^2 - 2<x_r, x_j>.
    # The per-row constant ||x_r||^2 does not change argmax/argmin, so mine on
    # `half` and add it back on the mined (bm, 1) vectors only.
    half = sq_row - 2.0 * gram                                # (bm, n)

    big = jnp.float32(1e30)
    ap_half = jnp.max(jnp.where(mask, half, -big), axis=1, keepdims=True)  # (bm,1)
    an_half = jnp.min(jnp.where(mask, big, half), axis=1, keepdims=True)   # (bm,1)

    sq_col = jnp.sum(xr32 * xr32, axis=1, keepdims=True)      # (bm, 1) = ||x_r||^2

    # clamp before sqrt: guards fp cancellation and the -1e30 sentinel.
    dist_ap = jnp.sqrt(jnp.maximum(ap_half + sq_col, 0.0))    # sqrt on 2*bm values only
    dist_an = jnp.sqrt(jnp.maximum(an_half + sq_col, 0.0))

    # MarginRankingLoss(margin), y=1: max(0, dist_ap - dist_an + margin)
    return jnp.sum(jnp.maximum(dist_ap - dist_an + margin, 0.0))


def _triplet_kernel_iota(xr_ref, xc_ref, sqr_ref, out_ref, acc_ref, *,
                         margin, eps, batch_size, n, bm):
    """Default-targets path: labels are arange(batch_size) tiled view_num times,
    so the (bm, n) equality mask is built from iotas (no label tensors)."""
    i = pl.program_id(0)

    @pl.when(i == 0)
    def _init():
        acc_ref[0, 0] = jnp.float32(0.0)

    row_id = i * bm + jax.lax.broadcasted_iota(jnp.int32, (bm, n), 0)
    col_id = jax.lax.broadcasted_iota(jnp.int32, (bm, n), 1)
    mask = (row_id % batch_size) == (col_id % batch_size)

    acc_ref[0, 0] += _block_loss(xr_ref[...], xc_ref[...], sqr_ref[...],
                                 mask, margin)

    @pl.when(i == pl.num_programs(0) - 1)
    def _finalize():
        out_ref[0, 0] = acc_ref[0, 0] * jnp.float32(1.0 / n) + jnp.float32(eps)


def _triplet_kernel_labels(xr_ref, xc_ref, sqr_ref, trow_ref, tcol_ref,
                           out_ref, acc_ref, *, margin, eps, n):
    """Explicit-targets fallback: labels passed as (1, n) row + (n, 1) column."""
    i = pl.program_id(0)

    @pl.when(i == 0)
    def _init():
        acc_ref[0, 0] = jnp.float32(0.0)

    mask = tcol_ref[...] == trow_ref[...]     # (bm, 1) == (1, n) -> (bm, n)

    acc_ref[0, 0] += _block_loss(xr_ref[...], xc_ref[...], sqr_ref[...],
                                 mask, margin)

    @pl.when(i == pl.num_programs(0) - 1)
    def _finalize():
        out_ref[0, 0] = acc_ref[0, 0] * jnp.float32(1.0 / n) + jnp.float32(eps)


def _pick_block_rows(n, cap=256):
    if n <= cap:
        return n
    for b in (256, 128, 64, 32, 16, 8):
        if n % b == 0:
            return b
    return n  # odd large n: fall back to a single block


def _compiler_params(n, d, bm, dtype_bytes):
    kwargs = dict(dimension_semantics=("arbitrary",))
    # rough VMEM estimate: gram/half/selects (f32) + resident columns + row block
    est = 4 * (4 * bm * n) + dtype_bytes * (2 * n * d + 2 * bm * d)
    if est > (12 << 20):
        kwargs["vmem_limit_bytes"] = int(min(max(2 * est, 32 << 20), 64 << 20))
    return pltpu.CompilerParams(**kwargs)


class TripletLossPallas:
    """JAX/Pallas port of FLAlgorithms.curriculum.cl_score.TripletLoss (p=2)."""

    def __init__(self, margin=0.5, batch_size=32, view_num=1, p=2):
        assert p == 2, "only p=2 (default) is implemented"
        self.margin = float(margin)
        self.eps = 1e-07
        self.batch_size = int(batch_size)
        self.view_num = int(view_num)
        # self.targets = cat([arange(batch_size)] * view_num)
        self.targets = jnp.concatenate(
            [jnp.arange(batch_size, dtype=jnp.int32) for _ in range(view_num)], axis=0
        )

    def __call__(self, inputs, targets=None):
        n, d = inputs.shape
        bm = _pick_block_rows(n)
        grid = (n // bm,)

        # Tiny (1, n) f32 vector of per-column squared norms.  Computed once
        # outside the kernel (4n bytes of extra DMA) so the kernel never needs
        # a sublane<->lane transpose; `inputs` itself stays in its native dtype.
        x32 = inputs.astype(jnp.float32)
        sq_row = jnp.sum(x32 * x32, axis=1)[None, :]            # (1, n) f32

        x_row_spec = pl.BlockSpec((bm, d), lambda i: (i, 0))
        x_col_spec = pl.BlockSpec((n, d), lambda i: (0, 0))     # resident across grid
        sq_spec = pl.BlockSpec((1, n), lambda i: (0, 0))
        out_spec = pl.BlockSpec((1, 1), lambda i: (0, 0),
                                memory_space=pltpu.MemorySpace.SMEM)

        common = dict(
            out_shape=jax.ShapeDtypeStruct((1, 1), jnp.float32),
            grid=grid,
            out_specs=out_spec,
            scratch_shapes=[pltpu.SMEM((1, 1), jnp.float32)],
            compiler_params=_compiler_params(n, d, bm, inputs.dtype.itemsize),
        )

        if targets is None:
            kernel = functools.partial(
                _triplet_kernel_iota, margin=self.margin, eps=self.eps,
                batch_size=self.batch_size, n=n, bm=bm)
            out = pl.pallas_call(
                kernel,
                in_specs=[x_row_spec, x_col_spec, sq_spec],
                **common,
            )(inputs, inputs, sq_row)
        else:
            targets = targets.astype(jnp.int32)
            trow = targets.reshape(1, n)
            tcol = targets.reshape(n, 1)
            kernel = functools.partial(
                _triplet_kernel_labels, margin=self.margin, eps=self.eps, n=n)
            out = pl.pallas_call(
                kernel,
                in_specs=[x_row_spec, x_col_spec, sq_spec,
                          pl.BlockSpec((1, n), lambda i: (0, 0)),
                          pl.BlockSpec((bm, 1), lambda i: (i, 0))],
                **common,
            )(inputs, inputs, sq_row, trow, tcol)

        return out[0, 0]


def _reference(inputs, targets, margin, eps):
    """Pure-JAX transcription of the PyTorch forward (for verification)."""
    x = inputs.astype(jnp.float32)
    diff = x[:, None, :] - x[None, :, :]
    dist = jnp.sqrt(jnp.sum(diff * diff, axis=2))
    mask = targets[:, None] == targets[None, :]
    dist_ap = jnp.max(jnp.where(mask, dist, -jnp.inf), axis=1)
    dist_an = jnp.min(jnp.where(mask, jnp.inf, dist), axis=1)
    return jnp.mean(jnp.maximum(dist_ap - dist_an + margin, 0.0)) + eps


if __name__ == "__main__":
    key = jax.random.PRNGKey(0)
    batch_size, view_num, feat_dim = 8, 2, 32
    n = batch_size * view_num
    x = jax.random.normal(key, (n, feat_dim), dtype=jnp.float32)

    loss_mod = TripletLossPallas(margin=0.5, batch_size=batch_size,
                                 view_num=view_num, p=2)

    # Default-targets path (mask built in-kernel from iotas, no label tensors).
    loss = loss_mod(x)
    jax.block_until_ready(loss)
    ref = _reference(x, loss_mod.targets, loss_mod.margin, loss_mod.eps)
    assert jnp.allclose(loss, ref, atol=1e-4, rtol=1e-4), (loss, ref)

    # Explicit-targets fallback path.
    tgt = jnp.array([0, 1, 2, 3, 0, 1, 2, 3, 4, 4, 5, 5, 6, 6, 7, 7],
                    dtype=jnp.int32)
    loss2 = loss_mod(x, tgt)
    jax.block_until_ready(loss2)
    ref2 = _reference(x, tgt, loss_mod.margin, loss_mod.eps)
    assert jnp.allclose(loss2, ref2, atol=1e-4, rtol=1e-4), (loss2, ref2)

    print("KERNEL_OK")
</pallas_src>

<mosaic_0001>
module attributes {stable_mosaic.version = 11 : i64} {
  func.func @_triplet_kernel_iota(%arg0: i32, %arg1: memref<16x32xf32, #tpu.memory_space<vmem>>, %arg2: memref<16x32xf32, #tpu.memory_space<vmem>>, %arg3: memref<1x16xf32, #tpu.memory_space<vmem>>, %arg4: memref<1x1xf32, #tpu.memory_space<smem>>, %arg5: memref<1x1xf32, #tpu.memory_space<smem>>) attributes {dimension_semantics = [#tpu.dimension_semantics<arbitrary>], iteration_bounds = array<i64: 1>, scalar_prefetch = 0 : i64, scratch_operands = 1 : i64, tpu.core_type = #tpu.core_type<tc>, window_params = [{transform_indices = @transform_0, window_bounds = array<i64: 16, 32>}, {pipeline_mode = #tpu.pipeline_mode<synchronous>, transform_indices = @transform_1, window_bounds = array<i64: 16, 32>}, {pipeline_mode = #tpu.pipeline_mode<synchronous>, transform_indices = @transform_2, window_bounds = array<i64: 1, 16>}, {transform_indices = @transform_3, window_bounds = array<i64: 1, 1>}]} {
    %c0_i32 = arith.constant 0 : i32
    %0 = arith.cmpi eq, %arg0, %c0_i32 : i32
    %1 = arith.extui %0 : i1 to i32
    %c0_i32_0 = arith.constant 0 : i32
    %2 = arith.cmpi ne, %1, %c0_i32_0 : i32
    scf.if %2 {
      %cst_34 = arith.constant 0.000000e+00 : f32
      %c0_35 = arith.constant 0 : index
      %c0_36 = arith.constant 0 : index
      %84 = memref.load %arg5[%c0_35, %c0_36] : memref<1x1xf32, #tpu.memory_space<smem>>
      memref.store %cst_34, %arg5[%c0_35, %c0_36] : memref<1x1xf32, #tpu.memory_space<smem>>
    } else {
    }
    %c16_i32 = arith.constant 16 : i32
    %3 = arith.muli %arg0, %c16_i32 : i32
    %4 = tpu.iota {dimensions = array<i32: 0>} : vector<16x16xi32>
    %5 = vector.broadcast %3 : i32 to vector<16x16xi32>
    %6 = arith.addi %5, %4 : vector<16x16xi32>
    %7 = tpu.iota {dimensions = array<i32: 1>} : vector<16x16xi32>
    %c8_i32 = arith.constant 8 : i32
    %c0_i32_1 = arith.constant 0 : i32
    %8 = arith.cmpi eq, %c8_i32, %c0_i32_1 : i32
    %c1_i32 = arith.constant 1 : i32
    %9 = arith.select %8, %c1_i32, %c8_i32 : i32
    %10 = vector.broadcast %9 : i32 to vector<16x16xi32>
    %11 = arith.remsi %6, %10 : vector<16x16xi32>
    %c0_i32_2 = arith.constant 0 : i32
    %12 = vector.broadcast %c0_i32_2 : i32 to vector<16x16xi32>
    %13 = arith.cmpi ne, %11, %12 : vector<16x16xi32>
    %c0_i32_3 = arith.constant 0 : i32
    %14 = vector.broadcast %c0_i32_3 : i32 to vector<16x16xi32>
    %15 = arith.cmpi slt, %11, %14 : vector<16x16xi32>
    %c0_i32_4 = arith.constant 0 : i32
    %16 = arith.cmpi slt, %9, %c0_i32_4 : i32
    %17 = vector.broadcast %16 : i1 to vector<16x16xi1>
    %18 = vector.broadcast %17 : vector<16x16xi1> to vector<16x16xi1>
    %19 = arith.xori %15, %18 : vector<16x16xi1>
    %20 = arith.andi %19, %13 : vector<16x16xi1>
    %21 = vector.broadcast %9 : i32 to vector<16x16xi32>
    %22 = arith.addi %11, %21 : vector<16x16xi32>
    %23 = arith.select %20, %22, %11 : vector<16x16xi1>, vector<16x16xi32>
    %c8_i32_5 = arith.constant 8 : i32
    %c0_i32_6 = arith.constant 0 : i32
    %24 = arith.cmpi eq, %c8_i32_5, %c0_i32_6 : i32
    %c1_i32_7 = arith.constant 1 : i32
    %25 = arith.select %24, %c1_i32_7, %c8_i32_5 : i32
    %26 = vector.broadcast %25 : i32 to vector<16x16xi32>
    %27 = arith.remsi %7, %26 : vector<16x16xi32>
    %c0_i32_8 = arith.constant 0 : i32
    %28 = vector.broadcast %c0_i32_8 : i32 to vector<16x16xi32>
    %29 = arith.cmpi ne, %27, %28 : vector<16x16xi32>
    %c0_i32_9 = arith.constant 0 : i32
    %30 = vector.broadcast %c0_i32_9 : i32 to vector<16x16xi32>
    %31 = arith.cmpi slt, %27, %30 : vector<16x16xi32>
    %c0_i32_10 = arith.constant 0 : i32
    %32 = arith.cmpi slt, %25, %c0_i32_10 : i32
    %33 = vector.broadcast %32 : i1 to vector<16x16xi1>
    %34 = vector.broadcast %33 : vector<16x16xi1> to vector<16x16xi1>
    %35 = arith.xori %31, %34 : vector<16x16xi1>
    %36 = arith.andi %35, %29 : vector<16x16xi1>
    %37 = vector.broadcast %25 : i32 to vector<16x16xi32>
    %38 = arith.addi %27, %37 : vector<16x16xi32>
    %39 = arith.select %36, %38, %27 : vector<16x16xi1>, vector<16x16xi32>
    %40 = arith.cmpi eq, %23, %39 : vector<16x16xi32>
    %c0 = arith.constant 0 : index
    %c0_11 = arith.constant 0 : index
    %41 = memref.load %arg5[%c0, %c0_11] : memref<1x1xf32, #tpu.memory_space<smem>>
    %c0_12 = arith.constant 0 : index
    %c0_13 = arith.constant 0 : index
    %42 = vector.load %arg1[%c0_12, %c0_13] : memref<16x32xf32, #tpu.memory_space<vmem>>, vector<16x32xf32>
    %c0_14 = arith.constant 0 : index
    %c0_15 = arith.constant 0 : index
    %43 = vector.load %arg2[%c0_14, %c0_15] : memref<16x32xf32, #tpu.memory_space<vmem>>, vector<16x32xf32>
    %c0_16 = arith.constant 0 : index
    %c0_17 = arith.constant 0 : index
    %44 = vector.load %arg3[%c0_16, %c0_17] : memref<1x16xf32, #tpu.memory_space<vmem>>, vector<1x16xf32>
    %cst = arith.constant dense<0.000000e+00> : vector<16x16xf32>
    %45 = tpu.matmul %42, %43, %cst {dimension_numbers = #tpu.dot_dimension_numbers<[1], [1], [0], [0], [0, 0, 1, 0], [], []>} : vector<16x32xf32>, vector<16x32xf32>, vector<16x16xf32> -> vector<16x16xf32>
    %cst_18 = arith.constant 2.000000e+00 : f32
    %46 = vector.broadcast %cst_18 : f32 to vector<16x16xf32>
    %47 = arith.mulf %46, %45 : vector<16x16xf32>
    %48 = vector.broadcast %44 : vector<1x16xf32> to vector<16x16xf32>
    %49 = arith.subf %48, %47 : vector<16x16xf32>
    %cst_19 = arith.constant 0.000000e+00 : f32
    %cst_20 = arith.constant 1.000000e+30 : f32
    %50 = arith.subf %cst_19, %cst_20 : f32
    %51 = vector.broadcast %50 : f32 to vector<16x16xf32>
    %52 = arith.select %40, %49, %51 : vector<16x16xi1>, vector<16x16xf32>
    %cst_21 = arith.constant dense<0xFF800000> : vector<16xf32>
    %53 = vector.multi_reduction <maximumf>, %52, %cst_21 [1] : vector<16x16xf32> to vector<16xf32>
    %54 = vector.shape_cast %53 : vector<16xf32> to vector<16x1xf32>
    %cst_22 = arith.constant 1.000000e+30 : f32
    %55 = vector.broadcast %cst_22 : f32 to vector<16x16xf32>
    %56 = arith.select %40, %55, %49 : vector<16x16xi1>, vector<16x16xf32>
    %cst_23 = arith.constant dense<0x7F800000> : vector<16xf32>
    %57 = vector.multi_reduction <minimumf>, %56, %cst_23 [1] : vector<16x16xf32> to vector<16xf32>
    %58 = vector.shape_cast %57 : vector<16xf32> to vector<16x1xf32>
    %59 = arith.mulf %42, %42 : vector<16x32xf32>
    %cst_24 = arith.constant dense<0.000000e+00> : vector<16xf32>
    %60 = vector.multi_reduction <add>, %59, %cst_24 [1] : vector<16x32xf32> to vector<16xf32>
    %61 = vector.shape_cast %60 : vector<16xf32> to vector<16x1xf32>
    %62 = arith.addf %54, %61 : vector<16x1xf32>
    %cst_25 = arith.constant 0.000000e+00 : f32
    %63 = vector.broadcast %cst_25 : f32 to vector<16x1xf32>
    %64 = arith.maximumf %62, %63 : vector<16x1xf32>
    %65 = math.sqrt %64 : vector<16x1xf32>
    %66 = arith.addf %58, %61 : vector<16x1xf32>
    %cst_26 = arith.constant 0.000000e+00 : f32
    %67 = vector.broadcast %cst_26 : f32 to vector<16x1xf32>
    %68 = arith.maximumf %66, %67 : vector<16x1xf32>
    %69 = math.sqrt %68 : vector<16x1xf32>
    %70 = arith.subf %65, %69 : vector<16x1xf32>
    %cst_27 = arith.constant 5.000000e-01 : f32
    %71 = vector.broadcast %cst_27 : f32 to vector<16x1xf32>
    %72 = arith.addf %70, %71 : vector<16x1xf32>
    %cst_28 = arith.constant 0.000000e+00 : f32
    %73 = vector.broadcast %cst_28 : f32 to vector<16x1xf32>
    %74 = arith.maximumf %72, %73 : vector<16x1xf32>
    %75 = vector.shape_cast %74 : vector<16x1xf32> to vector<1x16x1xf32>
    %cst_29 = arith.constant dense<0.000000e+00> : vector<1xf32>
    %76 = vector.multi_reduction <add>, %75, %cst_29 [1, 2] : vector<1x16x1xf32> to vector<1xf32>
    %77 = vector.shape_cast %76 : vector<1xf32> to vector<1x1x1xf32>
    %78 = vector.extract %77[0, 0, 0] : f32 from vector<1x1x1xf32>
    %79 = arith.addf %41, %78 : f32
    %c0_30 = arith.constant 0 : index
    %c0_31 = arith.constant 0 : index
    %80 = memref.load %arg5[%c0_30, %c0_31] : memref<1x1xf32, #tpu.memory_space<smem>>
    memref.store %79, %arg5[%c0_30, %c0_31] : memref<1x1xf32, #tpu.memory_space<smem>>
    %c0_i32_32 = arith.constant 0 : i32
    %81 = arith.cmpi eq, %arg0, %c0_i32_32 : i32
    %82 = arith.extui %81 : i1 to i32
    %c0_i32_33 = arith.constant 0 : i32
    %83 = arith.cmpi ne, %82, %c0_i32_33 : i32
    scf.if %83 {
      %c0_34 = arith.constant 0 : index
      %c0_35 = arith.constant 0 : index
      %84 = memref.load %arg5[%c0_34, %c0_35] : memref<1x1xf32, #tpu.memory_space<smem>>
      %cst_36 = arith.constant 6.250000e-02 : f32
      %85 = arith.mulf %84, %cst_36 : f32
      %cst_37 = arith.constant 1.000000e-07 : f32
      %86 = arith.addf %85, %cst_37 : f32
      %c0_38 = arith.constant 0 : index
      %c0_39 = arith.constant 0 : index
      %87 = memref.load %arg4[%c0_38, %c0_39] : memref<1x1xf32, #tpu.memory_space<smem>>
      memref.store %86, %arg4[%c0_38, %c0_39] : memref<1x1xf32, #tpu.memory_space<smem>>
    } else {
    }
    return
  }
  func.func @transform_0(%arg0: i32) -> (i32, i32) {
    %c0_i32 = arith.constant 0 : i32
    %c0_i32_0 = arith.constant 0 : i32
    return %arg0, %c0_i32 : i32, i32
  }
  func.func @transform_1(%arg0: i32) -> (i32, i32) {
    %c0_i32 = arith.constant 0 : i32
    %c0_i32_0 = arith.constant 0 : i32
    %c0_i32_1 = arith.constant 0 : i32
    return %c0_i32, %c0_i32_0 : i32, i32
  }
  func.func @transform_2(%arg0: i32) -> (i32, i32) {
    %c0_i32 = arith.constant 0 : i32
    %c0_i32_0 = arith.constant 0 : i32
    %c0_i32_1 = arith.constant 0 : i32
    return %c0_i32, %c0_i32_0 : i32, i32
  }
  func.func @transform_3(%arg0: i32) -> (i32, i32) {
    %c0_i32 = arith.constant 0 : i32
    %c0_i32_0 = arith.constant 0 : i32
    %c0_i32_1 = arith.constant 0 : i32
    return %c0_i32, %c0_i32_0 : i32, i32
  }
}

</mosaic_0001>

<llo_original>
// kernel: tpu_custom_call.1
$region0: #{tpu_custom_call.1}
  #allocation0 [shape = 'u32[]', space=smem, size = 0x4, offset = 0x4, fixed_abs, tag = 'smem constant byte address 0x4 - core index']
  #allocation1 [shape = 'u32[72,128]{1,0:T(1,128)}', space=vmem, size = 0x9000, scoped, tag = 'internal scratch']
  #allocation2 [shape = 'f32[1,1]{1,0:T(1,128)}', space=smem, size = 0x200, scoped, tag = 'scratch operand']
  %s0 = inlined_call_operand.hbm [shape: f32[16,32], index: 0, kind: input, shape index: {}]
  %s1 = inlined_call_operand.hbm [shape: f32[16,32], index: 1, kind: input, shape index: {}]
  %s2 = inlined_call_operand.vmem [shape: f32[1,16], index: 2, kind: input, shape index: {}]
  %s3 = inlined_call_operand.hbm [shape: f32[1,1], index: 3, kind: output, shape index: {}]
  %s4 = sld [smem:[#allocation0]]
  $region38: #{tpu_custom_call.1} parent=0
    _
  %s6 = ssub.s32 1, %s4
  %s7 = scalar_select 0, %s6, %s4
  $region1: #{tpu_custom_call.1} parent=0
    #allocation3 [shape = 'u8[8192]{0}', space=vmem, size = 0x2000, scoped, tag = 'input window, operand 0, single buffered']
    #allocation4 [shape = 's32[1]{0}', space=sflag, size = 0x4, scoped, tag = 'scoped memory for tpu_custom_call.1']
    #allocation5 [shape = 's32[1]{0}', space=sflag, size = 0x4, scoped, tag = 'scoped memory for tpu_custom_call.1']
    #allocation6 [shape = 'u8[8192]{0}', space=vmem, size = 0x2000, scoped, tag = 'input window, operand 1, single buffered']
    #allocation7 [shape = 's32[1]{0}', space=sflag, size = 0x4, scoped, tag = 'scoped memory for tpu_custom_call.1']
    #allocation8 [shape = 'u8[512]{0}', space=smem, size = 0x200, scoped, tag = 'output window, operand 0, single buffered']
    %8 = vsyncpa [#allocation4], 0
    %9 = vsyncpa [#allocation7], 0
    %10 = vsyncpa [#allocation5], 0
    // Predicated region
    $region2: #{tpu_custom_call.1} parent=1 // pred_check
      _
    $region3: #{tpu_custom_call.1} parent=1 // pred_check_branch
      %12 = sbr.rel (0) target = $region5
    $region4: #{tpu_custom_call.1} parent=1 // pred_region
      %14 = vsyncadd [#allocation4], 0
      %s15 = sshll.u32 %s0, 4
      %s16 = int_to_ptr.hbm [resolvable:$true] %s15
      %s17 = sshll.u32 [#allocation3], 4
      %s18 = int_to_ptr.vmem [resolvable:$true] %s17
      %23 = dma.hbm_to_vmem [thread:$0]  %s16, 256, %s18, [#allocation4], 128, 128, 8
    $region5: #{tpu_custom_call.1} parent=1 // pred_fallthru
      _
    // Predicated region
    $region6: #{tpu_custom_call.1} parent=1 // pred_check
      _
    $region7: #{tpu_custom_call.1} parent=1 // pred_check_branch
      %25 = sbr.rel (0) target = $region9
    $region8: #{tpu_custom_call.1} parent=1 // pred_region
      %27 = vsyncadd [#allocation7], 0
      %s28 = sshll.u32 %s1, 4
      %s29 = int_to_ptr.hbm [resolvable:$true] %s28
      %s30 = sshll.u32 [#allocation6], 4
      %s31 = int_to_ptr.vmem [resolvable:$true] %s30
      %36 = dma.hbm_to_vmem [thread:$0]  %s29, 256, %s31, [#allocation7], 128, 128, 8
    $region9: #{tpu_custom_call.1} parent=1 // pred_fallthru
      _
    // Predicated region
    $region10: #{tpu_custom_call.1} parent=1 // pred_check
      _
    $region11: #{tpu_custom_call.1} parent=1 // pred_check_branch
      %38 = sbr.rel (0) target = $region13
    $region12: #{tpu_custom_call.1} parent=1 // pred_region
      _
    $region13: #{tpu_custom_call.1} parent=1 // pred_fallthru
      _
    // Predicated region
    $region14: #{tpu_custom_call.1} parent=1 // pred_check
      _
    $region15: #{tpu_custom_call.1} parent=1 // pred_check_branch
      %40 = sbr.rel (0) target = $region17
    $region16: #{tpu_custom_call.1} parent=1 // pred_region
      %42 = dma.done [#allocation4], 256
    $region17: #{tpu_custom_call.1} parent=1 // pred_fallthru
      _
    // Predicated region
    $region18: #{tpu_custom_call.1} parent=1 // pred_check
      _
    $region19: #{tpu_custom_call.1} parent=1 // pred_check_branch
      %44 = sbr.rel (0) target = $region21
    $region20: #{tpu_custom_call.1} parent=1 // pred_region
      %46 = dma.done [#allocation7], 256
    $region21: #{tpu_custom_call.1} parent=1 // pred_fallthru
      _
    %p47 = scmp.eq.s32.totalorder 0, 0
    // Predicated region
    $region22: #{tpu_custom_call.1} parent=1 // pred_check
      %p48 = pneg %p47
    $region23: #{tpu_custom_call.1} parent=1 // pred_check_branch
      %50 = sbr.rel (%p48) target = $region25
    $region24: #{tpu_custom_call.1} parent=1 // pred_region
      %s51 = scalar_lea.smem [#allocation2], 0
      %52 = sst [smem:[%s51]] 0.0
    $region25: #{tpu_custom_call.1} parent=1 // pred_fallthru
      _
    %s53 = smul.u32 0, 16
    %v54 = vlaneseq
    %v55 = vshrl.u32 %v54, 7
    %v56 = vadd.s32 %v55, 8
    %v57 = vstv %s53
    %v58 = vadd.s32 %v57, %v55
    %v59 = vadd.s32 %v57, %v56
    %v60 = vlaneseq
    %v61 = vand.u32 %v60, 127
    %vm62 = vcmp.lt.s32.totalorder %v58, 0
    %v63 = vsub.s32 0, %v58
    %v64 = vsel %vm62, %v63, %v58
    %v65 = vshrl.u32 %v64, 3
    %v66 = vand.u32 %v64, 7
    %v67 = vsub.s32 0, %v66
    %v68 = vsel %vm62, %v67, %v66
    %vm69 = vcmp.lt.s32.totalorder %v59, 0
    %v70 = vsub.s32 0, %v59
    %v71 = vsel %vm69, %v70, %v59
    %v72 = vshrl.u32 %v71, 3
    %v73 = vand.u32 %v71, 7
    %v74 = vsub.s32 0, %v73
    %v75 = vsel %vm69, %v74, %v73
    %vm76 = vcmp.ne.s32.totalorder %v68, 0
    %vm77 = vcmp.ne.s32.totalorder %v75, 0
    %vm78 = vcmp.lt.s32.totalorder %v68, 0
    %vm79 = vcmp.lt.s32.totalorder %v75, 0
    %vm80 = vmand %vm78, %vm76
    %vm81 = vmand %vm79, %vm77
    %v82 = vadd.s32 %v68, 8
    %v83 = vadd.s32 %v75, 8
    %v84 = vsel %vm80, %v82, %v68
    %v85 = vsel %vm81, %v83, %v75
    %vm86 = vcmp.lt.s32.totalorder %v61, 0
    %v87 = vsub.s32 0, %v61
    %v88 = vsel %vm86, %v87, %v61
    %v89 = vshrl.u32 %v88, 3
    %v90 = vand.u32 %v88, 7
    %v91 = vsub.s32 0, %v90
    %v92 = vsel %vm86, %v91, %v90
    %vm93 = vcmp.ne.s32.totalorder %v92, 0
    %vm94 = vcmp.lt.s32.totalorder %v92, 0
    %vm95 = vmand %vm94, %vm93
    %v96 = vadd.s32 %v92, 8
    %v97 = vsel %vm95, %v96, %v92
    %vm98 = vcmp.eq.s32.totalorder %v84, %v97
    %vm99 = vcmp.eq.s32.totalorder %v85, %v97
    %s100 = sld [smem:[#allocation2]]
    %v101 = vld [vmem:[#allocation3] sm:$0xff]
    %v102 = vld [vmem:[#allocation3 + $0x8] sm:$0xff]
    %v103 = vld [vmem:[#allocation6] sm:$0xff]
    %v104 = vld [vmem:[#allocation6 + $0x8] sm:$0xff]
    %v105 = vld [vmem:[%s2] sm:$0x1]
    %vm106 = vcmask 261120
    %v108 = vsel %vm106, %v101, 0
    %v111 = vsel %vm106, %v102, 0
    %v114 = vsel %vm106, %v103, 0
    %v117 = vsel %vm106, %v104, 0
    %119 = vmatpush.xpose.msra.mxu0 0.0
    %120 = vmatpush.xpose.msra.mxu0 0.0
    %121 = vmatpush.xpose.msra.mxu0 0.0
    %122 = vmatpush.xpose.msra.mxu0 0.0
    %123 = vmatpush.xpose.msra.mxu0 0.0
    %124 = vmatpush.xpose.msra.mxu0 0.0
    %125 = vmatpush.xpose.msra.mxu0 0.0
    %126 = vmatpush.xpose.msra.mxu0 0.0
    %127 = vmatpush.xpose.msra.mxu0 0.0
    %128 = vmatpush.xpose.msra.mxu0 0.0
    %129 = vmatpush.xpose.msra.mxu0 0.0
    %130 = vmatpush.xpose.msra.mxu0 0.0
    %131 = vmatpush.xpose.msra.mxu0 0.0
    %132 = vmatpush.xpose.msra.mxu0 0.0
    %133 = vmatpush.xpose.msra.mxu0 %v117
    %134 = vmatpush.xpose.msra.mxu0 %v114
    %135 = vmatmul.f32.gmra.mxu0 %v108
    %v136 = vpop.f32.mrf.mxu0
    %v137 = vadd.f32 0.0, %v136
    %138 = vmatmul.f32.gmra.mxu0 %v111
    %v139 = vpop.f32.mrf.mxu0
    %v140 = vadd.f32 0.0, %v139
    %141 = vdwg.mxu0
    %v142 = vmul.f32 %v137, 2.0
    %v143 = vmul.f32 %v140, 2.0
    %v145 = vperm.slane %v105, 0
    %v147 = vsub.f32 %v145, %v142
    %v148 = vsub.f32 %v145, %v143
    %v149 = vsel %vm98, %v147, -1e+30
    %v150 = vsel %vm99, %v148, -1e+30
    %vm151 = vcmask 130048
    %v152 = vsel %vm151, %v149, -inf
    %153 = vmax.xlane.f32.xlu0 %v152
    %v154 = vpop.xlane.xlu0 %153
    %v155 = vsel %vm151, %v150, -inf
    %156 = vmax.xlane.f32.xlu0 %v155
    %v157 = vpop.xlane.xlu0 %156
    %v158 = vsel %vm98, 1e+30, %v147
    %v159 = vsel %vm99, 1e+30, %v148
    %v160 = vsel %vm151, %v158, inf
    %161 = vmin.xlane.f32.xlu0 %v160
    %v162 = vpop.xlane.xlu0 %161
    %v163 = vsel %vm151, %v159, inf
    %164 = vmin.xlane.f32.xlu0 %v163
    %v165 = vpop.xlane.xlu0 %164
    %v166 = vmul.f32 %v101, %v101
    %v167 = vmul.f32 %v102, %v102
    %v168 = vsel %vm106, %v166, 0.0
    %169 = vadd.xlane.f32.xlu0 %v168
    %v170 = vpop.xlane.xlu0 %169
    %v171 = vsel %vm106, %v167, 0.0
    %172 = vadd.xlane.f32.xlu0 %v171
    %v173 = vpop.xlane.xlu0 %172
    %v174 = vadd.f32 %v154, %v170
    %v175 = vadd.f32 %v157, %v173
    %v176 = vmax.f32 %v174, 0.0
    %v177 = vmax.f32 %v175, 0.0
    %v178 = vrsqrt.pop %v176
    %v179 = vmul.f32 %v178, %v176
    %v180 = vmul.f32 %v179, %v178
    %v181 = vmul.f32 0.5, %v180
    %v182 = vsub.f32 1.5, %v181
    %v183 = vmul.f32 %v178, %v182
    %v184 = vmul.f32 %v176, %v183
    %vm185 = vcmp.eq.f32.partialorder %v176, inf
    %v186 = vsel %vm185, %v176, %v184
    %vm187 = vcmp.eq.f32.partialorder %v176, 0.0
    %v188 = vand.u32 %v176, 2147483648
    %v189 = vsel %vm187, %v188, %v186
    %v190 = vrsqrt.pop %v177
    %v191 = vmul.f32 %v190, %v177
    %v192 = vmul.f32 %v191, %v190
    %v193 = vmul.f32 0.5, %v192
    %v194 = vsub.f32 1.5, %v193
    %v195 = vmul.f32 %v190, %v194
    %v196 = vmul.f32 %v177, %v195
    %vm197 = vcmp.eq.f32.partialorder %v177, inf
    %v198 = vsel %vm197, %v177, %v196
    %vm199 = vcmp.eq.f32.partialorder %v177, 0.0
    %v200 = vand.u32 %v177, 2147483648
    %v201 = vsel %vm199, %v200, %v198
    %v202 = vadd.f32 %v162, %v170
    %v203 = vadd.f32 %v165, %v173
    %v204 = vmax.f32 %v202, 0.0
    %v205 = vmax.f32 %v203, 0.0
    %v206 = vrsqrt.pop %v204
    %v207 = vmul.f32 %v206, %v204
    %v208 = vmul.f32 %v207, %v206
    %v209 = vmul.f32 0.5, %v208
    %v210 = vsub.f32 1.5, %v209
    %v211 = vmul.f32 %v206, %v210
    %v212 = vmul.f32 %v204, %v211
    %vm213 = vcmp.eq.f32.partialorder %v204, inf
    %v214 = vsel %vm213, %v204, %v212
    %vm215 = vcmp.eq.f32.partialorder %v204, 0.0
    %v216 = vand.u32 %v204, 2147483648
    %v217 = vsel %vm215, %v216, %v214
    %v218 = vrsqrt.pop %v205
    %v219 = vmul.f32 %v218, %v205
    %v220 = vmul.f32 %v219, %v218
    %v221 = vmul.f32 0.5, %v220
    %v222 = vsub.f32 1.5, %v221
    %v223 = vmul.f32 %v218, %v222
    %v224 = vmul.f32 %v205, %v223
    %vm225 = vcmp.eq.f32.partialorder %v205, inf
    %v226 = vsel %vm225, %v205, %v224
    %vm227 = vcmp.eq.f32.partialorder %v205, 0.0
    %v228 = vand.u32 %v205, 2147483648
    %v229 = vsel %vm227, %v228, %v226
    %v230 = vsub.f32 %v189, %v217
    %v231 = vsub.f32 %v201, %v229
    %v232 = vadd.f32 %v230, 0.5
    %v233 = vadd.f32 %v231, 0.5
    %v234 = vmax.f32 %v232, 0.0
    %v235 = vmax.f32 %v233, 0.0
    %vm236 = vcmask 7168
    %v237 = vsel %vm236, %v234, 0.0
    %v238 = vsel %vm236, %v235, 0.0
    %v239 = vadd.f32 %v237, %v238
    %240 = vadd.xlane.f32.xlu0 %v239
    %v241 = vpop.xlane.xlu0 %240
    %v242 = vrot.slane %v241, 4
    %v243 = vadd.f32 %v241, %v242
    %v244 = vrot.slane %v243, 2
    %v245 = vadd.f32 %v243, %v244
    %v246 = vrot.slane %v245, 1
    %v247 = vadd.f32 %v245, %v246
    %s248 = vtos %v247
    %s249 = sadd.f32 %s100, %s248
    %s250 = scalar_lea.smem [#allocation2], 0
    %251 = sst [smem:[%s250]] %s249
    // Predicated region
    $region26: #{tpu_custom_call.1} parent=1 // pred_check
      %p252 = pneg %p47
    $region27: #{tpu_custom_call.1} parent=1 // pred_check_branch
      %254 = sbr.rel (%p252) target = $region29
    $region28: #{tpu_custom_call.1} parent=1 // pred_region
      %s255 = sld [smem:[#allocation2]]
      %s256 = smul.f32 %s255, 0.0625
      %s257 = sadd.f32 %s256, 1e-07
      %s258 = scalar_lea.smem [#allocation8], 0
      %259 = sst [smem:[%s258]] %s257
    $region29: #{tpu_custom_call.1} parent=1 // pred_fallthru
      _
    // Predicated region
    $region30: #{tpu_custom_call.1} parent=1 // pred_check
      _
    $region31: #{tpu_custom_call.1} parent=1 // pred_check_branch
      %261 = sbr.rel (0) target = $region33
    $region32: #{tpu_custom_call.1} parent=1 // pred_region
      %263 = vsyncadd [#allocation5], 0
      %s265 = sshll.u32 %s3, 4
      %s266 = int_to_ptr.hbm [resolvable:$true] %s265
      %268 = dma.smem_to_hbm [#allocation8], 16, %s266, [#allocation5]
    $region33: #{tpu_custom_call.1} parent=1 // pred_fallthru
      _
    // Predicated region
    $region34: #{tpu_custom_call.1} parent=1 // pred_check
      _
    $region35: #{tpu_custom_call.1} parent=1 // pred_check_branch
      %270 = sbr.rel (0) target = $region37
    $region36: #{tpu_custom_call.1} parent=1 // pred_region
      %272 = dma.done [#allocation5], 16
    $region37: #{tpu_custom_call.1} parent=1 // pred_fallthru
      _
    %273 = sfence
    %274 = vsyncpa [#allocation4], 1
    %275 = vsyncpa [#allocation7], 1
    %276 = vsyncpa [#allocation5], 1

</llo_original>
